<compile_context>
chip_gen: v6e
topology: v6e:2x2x1
jax: 0.10.0
libtpu: 0.0.40
codegen_flags: <defaults>
</compile_context>

<pallas_src>
import jax
import jax.numpy as jnp
from jax.experimental import pallas as pl
from jax.experimental.pallas import tpu as pltpu


_MIB = 1024 * 1024


def _pick_tile(m, target, align, prefer_even_count=False):
    """Largest multiple of `align` <= target that divides m (fallback: m itself).

    With prefer_even_count=True, prefer a tile size giving an even number of
    tiles (>= 2) so the "parallel" row axis load-balances across v7x's 2 TCs.
    """
    cands = [t for t in range(align, min(target, m) + 1, align) if m % t == 0]
    if not cands:
        return m
    if prefer_even_count:
        even = [t for t in cands if (m // t) % 2 == 0]
        if even:
            return max(even)
    return max(cands)


def _gin_conv(A, x, wa, ba, wb, bb, *, tm, tk, out_dtype):
    """One GINConv layer: relu(MLP(A' @ x)) with the self term (1+eps)*I already
    folded into A' (eps = 0); MLP = Linear -> ReLU -> Linear, dropout = identity."""
    M = A.shape[0]
    f_in = x.shape[1]
    hidden = wa.shape[1]
    embed = wb.shape[1]
    small_k = f_in <= 4  # tiny-K contraction on the VPU; keep the MXU for A' @ x

    # Keep the (small) feature matrix resident in VMEM when it fits comfortably;
    # otherwise stream (tk, f_in) blocks along the reduction axis.
    x_resident = (M * f_in * x.dtype.itemsize) <= 4 * _MIB

    def kernel(a_ref, x_ref, wa_ref, ba_ref, wb_ref, bb_ref, out_ref, acc_ref):
        k = pl.program_id(1)

        @pl.when(k == 0)
        def _():
            acc_ref[...] = jnp.zeros_like(acc_ref)

        if x_resident:
            start = pl.multiple_of(k * tk, tk)
            x_blk = x_ref[pl.ds(start, tk), :]
        else:
            x_blk = x_ref[...]

        # int8 adjacency stream -> bf16 on the VPU (hides under the DMA), MXU dot,
        # f32 accumulate.  A' already contains the (1+eps)*I self term.
        a = a_ref[...].astype(jnp.bfloat16)
        acc_ref[...] += jnp.dot(a, x_blk, preferred_element_type=jnp.float32)

        @pl.when(k == pl.num_programs(1) - 1)
        def _():
            h = acc_ref[...]
            if small_k:
                # [tm, 3] @ [3, hidden] as f_in broadcast-FMAs on the VPU
                w = wa_ref[...]
                z = h[:, 0:1] * w[0:1, :]
                for kk in range(1, f_in):
                    z = z + h[:, kk:kk + 1] * w[kk:kk + 1, :]
            else:
                z = jnp.dot(h, wa_ref[...], preferred_element_type=jnp.float32)
            z = jnp.maximum(z + ba_ref[...], 0.0)                                 # Linear + ReLU
            z = jnp.dot(z, wb_ref[...], preferred_element_type=jnp.float32) + bb_ref[...]
            out_ref[...] = jnp.maximum(z, 0.0).astype(out_ref.dtype)              # outer F.relu; dropout = identity

    if x_resident:
        x_spec = pl.BlockSpec((M, f_in), lambda i, k: (0, 0))      # fetched once, stays in VMEM
        x_stream_bytes = M * f_in * x.dtype.itemsize
    else:
        x_spec = pl.BlockSpec((tk, f_in), lambda i, k: (k, 0))
        x_stream_bytes = (M // tm) * M * f_in * x.dtype.itemsize

    out_itemsize = jnp.dtype(out_dtype).itemsize
    w_bytes = 4 * (wa.size + ba.size + wb.size + bb.size)
    cost = pl.CostEstimate(
        flops=2 * M * M * f_in + 2 * M * f_in * hidden + 2 * M * hidden * embed,
        transcendentals=0,
        bytes_accessed=(A.size * A.dtype.itemsize + x_stream_bytes
                        + M * embed * out_itemsize + w_bytes),
    )

    # Explicit VMEM budget: 2x double-buffered int8 A tiles + x + out + acc + weights.
    # (v5e scoped default is only 16 MiB; v7x has 32 MiB scoped / 64 MiB physical.)
    need = (2 * tm * tk * A.dtype.itemsize
            + 2 * (M if x_resident else tk) * f_in * x.dtype.itemsize
            + 2 * tm * embed * out_itemsize
            + tm * f_in * 4
            + 2 * w_bytes)
    vmem_limit = int(min(max(2 * need, 32 * _MIB), 56 * _MIB))

    return pl.pallas_call(
        kernel,
        out_shape=jax.ShapeDtypeStruct((M, embed), out_dtype),
        grid_spec=pltpu.PrefetchScalarGridSpec(
            num_scalar_prefetch=0,
            grid=(M // tm, M // tk),
            in_specs=[
                # TODO(synk): if profiling still shows exposed A-DMA at tile boundaries,
                # add pipeline_mode=pl.Buffered(3) here (sweep 2 vs 3; re-check v7x VMEM).
                pl.BlockSpec((tm, tk), lambda i, k: (i, k)),        # int8 A' tile
                x_spec,                                             # feature matrix
                pl.BlockSpec((f_in, hidden), lambda i, k: (0, 0)),
                pl.BlockSpec((1, hidden), lambda i, k: (0, 0)),
                pl.BlockSpec((hidden, embed), lambda i, k: (0, 0)),
                pl.BlockSpec((1, embed), lambda i, k: (0, 0)),
            ],
            # TODO(synk): if the store epilogue shows up in traces, switch to a
            # lane-dense [M/8, 8*embed] output slab instead of embed(=16)-wide rows.
            out_specs=pl.BlockSpec((tm, embed), lambda i, k: (i, 0)),
            scratch_shapes=[pltpu.VMEM((tm, f_in), jnp.float32)],
        ),
        compiler_params=pltpu.CompilerParams(
            dimension_semantics=("parallel", "arbitrary"),
            vmem_limit_bytes=vmem_limit),
        cost_estimate=cost,
    )(A, x, wa, ba, wb, bb)


def _pool_head(x, wm, bm, wo, bo):
    """global_sum_pool + MLP head + output layer + sigmoid; all B graphs in ONE grid step."""
    B, N, embed = x.shape
    hidden = wm.shape[1]
    num_out = wo.shape[1]

    def kernel(x_ref, wm_ref, bm_ref, wo_ref, bo_ref, out_ref):
        # global sum pool over nodes (sublane reduction), batched over all graphs
        g = jnp.sum(x_ref[...].astype(jnp.float32), axis=1)                      # [B, embed]
        h = jnp.dot(g, wm_ref[...], preferred_element_type=jnp.float32) + bm_ref[...]
        h = jnp.maximum(h, 0.0)                                                  # ReLU; dropout = identity
        logits = jnp.dot(h, wo_ref[...], preferred_element_type=jnp.float32) + bo_ref[...]
        # sigmoid = EUP exp + exact reciprocal (faithful to the reference)
        out_ref[...] = pl.reciprocal(1.0 + jnp.exp(-logits), approx=False)

    cost = pl.CostEstimate(
        flops=2 * B * (N * embed + embed * hidden + hidden * num_out),
        transcendentals=B * num_out,
        bytes_accessed=(x.size * x.dtype.itemsize
                        + 4 * (wm.size + bm.size + wo.size + bo.size)
                        + 4 * B * num_out),
    )

    return pl.pallas_call(
        kernel,
        out_shape=jax.ShapeDtypeStruct((B, num_out), jnp.float32),
        grid=(1,),
        in_specs=[
            pl.BlockSpec((B, N, embed), lambda i: (0, 0, 0)),
            pl.BlockSpec((embed, hidden), lambda i: (0, 0)),
            pl.BlockSpec((1, hidden), lambda i: (0, 0)),
            pl.BlockSpec((hidden, num_out), lambda i: (0, 0)),
            pl.BlockSpec((1, num_out), lambda i: (0, 0)),
        ],
        out_specs=pl.BlockSpec((B, num_out), lambda i: (0, 0)),
        compiler_params=pltpu.CompilerParams(dimension_semantics=("arbitrary",)),
        cost_estimate=cost,
    )(x, wm, bm, wo, bo)


def init_params(key, embed_size, hidden_size, num_nodes):
    """Deterministic synthetic parameters.  Weights stored pre-transposed [in, out]."""
    ks = jax.random.split(key, 12)
    s = 0.1

    def w(k, shape):
        return jax.random.normal(k, shape, jnp.float32) * s

    return {
        # conv1 MLP: Linear(3, H), Linear(H, embed)
        "w1": w(ks[0], (3, hidden_size)),           "b1": w(ks[1], (1, hidden_size)),
        "w2": w(ks[2], (hidden_size, embed_size)),  "b2": w(ks[3], (1, embed_size)),
        # conv2 MLP: Linear(embed, H), Linear(H, embed)
        "w3": w(ks[4], (embed_size, hidden_size)),  "b3": w(ks[5], (1, hidden_size)),
        "w4": w(ks[6], (hidden_size, embed_size)),  "b4": w(ks[7], (1, embed_size)),
        # mlp head: Linear(embed, H)
        "wm": w(ks[8], (embed_size, hidden_size)),  "bm": w(ks[9], (1, hidden_size)),
        # output layer: Linear(H, num_nodes)
        "wo": w(ks[10], (hidden_size, num_nodes)),  "bo": w(ks[11], (1, num_nodes)),
    }


def gin_critic_forward(actions, node_features, edge_index, params):
    # ---- input preprocessing (mirrors the PyTorch reference) ----
    B, _, N = node_features.shape
    nf = node_features.astype(jnp.float32)[:, 0, :]            # squeeze feature axis (robust for B == 1)
    x0 = jnp.stack((actions[:, :, 0].astype(jnp.float32),
                    actions[:, :, 1].astype(jnp.float32),
                    nf), axis=2).reshape(B * N, 3)              # [M, 3]
    M = B * N

    # Per-batch node offsets, then the PyTorch-exact row-major reshape of the offset
    # [B, 2, E] tensor to [2, B*E] (faithful to what the reference module literally does).
    E = edge_index.shape[2]
    offsets = (jnp.arange(B, dtype=edge_index.dtype) * N)[:, None, None]
    ei = (edge_index + offsets).reshape(2, B * E)
    src, dst = ei[0], ei[1]

    # Dense adjacency with the GIN self term folded in: A' = A + (1+eps)*I, eps = 0.
    # Stored as int8 (edge multiplicities are tiny integers; exact while <= 127) and
    # converted to bf16 in-kernel, halving the dominant HBM stream of the aggregation.
    # TODO(synk): for large/static graphs, cache A' across calls or replace the O(M^2)
    # dense scatter + A'@x with an O(E) scalar-prefetch gather/segment-sum kernel.
    diag = jnp.arange(M, dtype=dst.dtype)
    rows = jnp.concatenate([dst, diag])
    cols = jnp.concatenate([src, diag])
    A = jnp.zeros((M, M), jnp.int32).at[rows, cols].add(1).astype(jnp.int8)

    embed = params["w2"].shape[1]

    # Node-row tiles ("parallel": megacore / 2-TC sharded) x neighbor-column tiles
    # ("arbitrary": reduction).  Large targets so each grid step moves multi-MiB of A';
    # tm aligned to 16 (bf16 sublane packing), preferring an even tile count (v7x).
    tm = _pick_tile(M, 512, 16, prefer_even_count=True)
    tk = _pick_tile(M, 4096, 128)

    x_bf = x0.astype(jnp.bfloat16)
    x1 = _gin_conv(A, x_bf, params["w1"], params["b1"], params["w2"], params["b2"],
                   tm=tm, tk=tk, out_dtype=jnp.bfloat16)        # [M, embed] bf16
    x2 = _gin_conv(A, x1, params["w3"], params["b3"], params["w4"], params["b4"],
                   tm=tm, tk=tk, out_dtype=jnp.float32)         # [M, embed] f32

    return _pool_head(x2.reshape(B, N, embed),
                      params["wm"], params["bm"], params["wo"], params["bo"])


if __name__ == "__main__":
    B = 2            # batch_size
    N = 8            # num_nodes
    embed_size = 16
    hidden_size = 32
    E = 12           # edges per graph

    key = jax.random.PRNGKey(0)
    k_act, k_nf, k_ei, k_par = jax.random.split(key, 4)

    actions = jax.random.normal(k_act, (B, N, 2), jnp.float32)
    node_features = jax.random.normal(k_nf, (B, 1, N), jnp.float32)
    edge_index = jax.random.randint(k_ei, (B, 2, E), 0, N, dtype=jnp.int32)

    params = init_params(k_par, embed_size, hidden_size, N)

    fwd = jax.jit(gin_critic_forward)
    out = jax.block_until_ready(fwd(actions, node_features, edge_index, params))

    assert out.shape == (B, N), out.shape
    assert bool(jnp.all(jnp.isfinite(out)))
    # sigmoid range check
    assert bool(jnp.all((out > -1e-3) & (out < 1.0 + 1e-3)))
    print("KERNEL_OK")
</pallas_src>

<mosaic_0001>
module attributes {stable_mosaic.version = 11 : i64} {
  func.func private @main(%arg0: i32) attributes {dimension_semantics = [#tpu.dimension_semantics<core_parallel>], iteration_bounds = array<i64: 2>, tpu.core_type = #tpu.core_type<sc_scalar_subcore>, window_params = []} {
    return
  }
}

module attributes {stable_mosaic.version = 11 : i64} {
  func.func private @main(%arg0: i32) attributes {dimension_semantics = [#tpu.dimension_semantics<core_parallel>], iteration_bounds = array<i64: 2>, tpu.core_type = #tpu.core_type<sc_scalar_subcore>, window_params = []} {
    return
  }
}

module attributes {stable_mosaic.version = 11 : i64} {
  func.func @kernel(%arg0: i32, %arg1: i32, %arg2: memref<16x16xi8, #tpu.memory_space<vmem>>, %arg3: memref<16x16xbf16, #tpu.memory_space<vmem>>, %arg4: memref<16x32xf32, #tpu.memory_space<vmem>>, %arg5: memref<1x32xf32, #tpu.memory_space<vmem>>, %arg6: memref<32x16xf32, #tpu.memory_space<vmem>>, %arg7: memref<1x16xf32, #tpu.memory_space<vmem>>, %arg8: memref<16x16xf32, #tpu.memory_space<vmem>>, %arg9: memref<16x16xf32, #tpu.memory_space<vmem>>) attributes {dimension_semantics = [#tpu.dimension_semantics<parallel>, #tpu.dimension_semantics<arbitrary>], iteration_bounds = array<i64: 1, 1>, scalar_prefetch = 0 : i64, scratch_operands = 1 : i64, tpu.core_type = #tpu.core_type<tc>, window_params = [{transform_indices = @transform_0, window_bounds = array<i64: 16, 16>}, {pipeline_mode = #tpu.pipeline_mode<synchronous>, transform_indices = @transform_1, window_bounds = array<i64: 16, 16>}, {pipeline_mode = #tpu.pipeline_mode<synchronous>, transform_indices = @transform_2, window_bounds = array<i64: 16, 32>}, {pipeline_mode = #tpu.pipeline_mode<synchronous>, transform_indices = @transform_3, window_bounds = array<i64: 1, 32>}, {pipeline_mode = #tpu.pipeline_mode<synchronous>, transform_indices = @transform_4, window_bounds = array<i64: 32, 16>}, {pipeline_mode = #tpu.pipeline_mode<synchronous>, transform_indices = @transform_5, window_bounds = array<i64: 1, 16>}, {transform_indices = @transform_6, window_bounds = array<i64: 16, 16>}]} {
    %c0_i32 = arith.constant 0 : i32
    %0 = arith.cmpi eq, %arg1, %c0_i32 : i32
    %1 = arith.extui %0 : i1 to i32
    %c0_i32_0 = arith.constant 0 : i32
    %2 = arith.cmpi ne, %1, %c0_i32_0 : i32
    scf.if %2 {
      %cst_9 = arith.constant 0.000000e+00 : f32
      %16 = vector.broadcast %cst_9 : f32 to vector<16x16xf32>
      %c0_10 = arith.constant 0 : index
      %c0_11 = arith.constant 0 : index
      %17 = vector.load %arg9[%c0_10, %c0_11] : memref<16x16xf32, #tpu.memory_space<vmem>>, vector<16x16xf32>
      tpu.vector_store %arg9[%c0_10, %c0_11], %16 {strides = array<i32>} : memref<16x16xf32, #tpu.memory_space<vmem>>, vector<16x16xf32>,
    } else {
    }
    %c16_i32 = arith.constant 16 : i32
    %3 = arith.muli %arg1, %c16_i32 : i32
    %4 = tpu.assume_multiple %3, 16 : i32
    %5 = arith.index_cast %4 : i32 to index
    %c0 = arith.constant 0 : index
    %6 = vector.load %arg3[%5, %c0] : memref<16x16xbf16, #tpu.memory_space<vmem>>, vector<16x16xbf16>
    %c0_1 = arith.constant 0 : index
    %c0_2 = arith.constant 0 : index
    %7 = vector.load %arg2[%c0_1, %c0_2] : memref<16x16xi8, #tpu.memory_space<vmem>>, vector<16x16xi8>
    %8 = arith.sitofp %7 : vector<16x16xi8> to vector<16x16xbf16>
    %c0_3 = arith.constant 0 : index
    %c0_4 = arith.constant 0 : index
    %9 = vector.load %arg9[%c0_3, %c0_4] : memref<16x16xf32, #tpu.memory_space<vmem>>, vector<16x16xf32>
    %cst = arith.constant dense<0.000000e+00> : vector<16x16xf32>
    %10 = tpu.matmul %8, %6, %cst {dimension_numbers = #tpu.dot_dimension_numbers<[1], [0], [0], [1], [0, 0, 1, 1], [], []>} : vector<16x16xbf16>, vector<16x16xbf16>, vector<16x16xf32> -> vector<16x16xf32>
    %11 = arith.addf %9, %10 : vector<16x16xf32>
    %c0_5 = arith.constant 0 : index
    %c0_6 = arith.constant 0 : index
    %12 = vector.load %arg9[%c0_5, %c0_6] : memref<16x16xf32, #tpu.memory_space<vmem>>, vector<16x16xf32>
    tpu.vector_store %arg9[%c0_5, %c0_6], %11 {strides = array<i32>} : memref<16x16xf32, #tpu.memory_space<vmem>>, vector<16x16xf32>,
    %c0_i32_7 = arith.constant 0 : i32
    %13 = arith.cmpi eq, %arg1, %c0_i32_7 : i32
    %14 = arith.extui %13 : i1 to i32
    %c0_i32_8 = arith.constant 0 : i32
    %15 = arith.cmpi ne, %14, %c0_i32_8 : i32
    scf.if %15 {
      %c0_9 = arith.constant 0 : index
      %c0_10 = arith.constant 0 : index
      %16 = vector.load %arg9[%c0_9, %c0_10] : memref<16x16xf32, #tpu.memory_space<vmem>>, vector<16x16xf32>
      %c0_11 = arith.constant 0 : index
      %c0_12 = arith.constant 0 : index
      %17 = vector.load %arg4[%c0_11, %c0_12] : memref<16x32xf32, #tpu.memory_space<vmem>>, vector<16x32xf32>
      %cst_13 = arith.constant dense<0.000000e+00> : vector<16x32xf32>
      %18 = tpu.matmul %16, %17, %cst_13 {dimension_numbers = #tpu.dot_dimension_numbers<[1], [0], [0], [1], [0, 0, 1, 1], [], []>} : vector<16x16xf32>, vector<16x32xf32>, vector<16x32xf32> -> vector<16x32xf32>
      %c0_14 = arith.constant 0 : index
      %c0_15 = arith.constant 0 : index
      %19 = vector.load %arg5[%c0_14, %c0_15] : memref<1x32xf32, #tpu.memory_space<vmem>>, vector<1x32xf32>
      %20 = vector.broadcast %19 : vector<1x32xf32> to vector<16x32xf32>
      %21 = arith.addf %18, %20 : vector<16x32xf32>
      %cst_16 = arith.constant 0.000000e+00 : f32
      %22 = vector.broadcast %cst_16 : f32 to vector<16x32xf32>
      %23 = arith.maximumf %21, %22 : vector<16x32xf32>
      %c0_17 = arith.constant 0 : index
      %c0_18 = arith.constant 0 : index
      %24 = vector.load %arg6[%c0_17, %c0_18] : memref<32x16xf32, #tpu.memory_space<vmem>>, vector<32x16xf32>
      %cst_19 = arith.constant dense<0.000000e+00> : vector<16x16xf32>
      %25 = tpu.matmul %23, %24, %cst_19 {dimension_numbers = #tpu.dot_dimension_numbers<[1], [0], [0], [1], [0, 0, 1, 1], [], []>} : vector<16x32xf32>, vector<32x16xf32>, vector<16x16xf32> -> vector<16x16xf32>
      %c0_20 = arith.constant 0 : index
      %c0_21 = arith.constant 0 : index
      %26 = vector.load %arg7[%c0_20, %c0_21] : memref<1x16xf32, #tpu.memory_space<vmem>>, vector<1x16xf32>
      %27 = vector.broadcast %26 : vector<1x16xf32> to vector<16x16xf32>
      %28 = arith.addf %25, %27 : vector<16x16xf32>
      %cst_22 = arith.constant 0.000000e+00 : f32
      %29 = vector.broadcast %cst_22 : f32 to vector<16x16xf32>
      %30 = arith.maximumf %28, %29 : vector<16x16xf32>
      %c0_23 = arith.constant 0 : index
      %c0_24 = arith.constant 0 : index
      %31 = vector.load %arg8[%c0_23, %c0_24] : memref<16x16xf32, #tpu.memory_space<vmem>>, vector<16x16xf32>
      tpu.vector_store %arg8[%c0_23, %c0_24], %30 {strides = array<i32>} : memref<16x16xf32, #tpu.memory_space<vmem>>, vector<16x16xf32>,
    } else {
    }
    return
  }
  func.func @transform_0(%arg0: i32, %arg1: i32) -> (i32, i32) {
    %c0_i32 = arith.constant 0 : i32
    return %arg0, %arg1 : i32, i32
  }
  func.func @transform_1(%arg0: i32, %arg1: i32) -> (i32, i32) {
    %c0_i32 = arith.constant 0 : i32
    %c0_i32_0 = arith.constant 0 : i32
    %c0_i32_1 = arith.constant 0 : i32
    return %c0_i32, %c0_i32_0 : i32, i32
  }
  func.func @transform_2(%arg0: i32, %arg1: i32) -> (i32, i32) {
    %c0_i32 = arith.constant 0 : i32
    %c0_i32_0 = arith.constant 0 : i32
    %c0_i32_1 = arith.constant 0 : i32
    return %c0_i32, %c0_i32_0 : i32, i32
  }
  func.func @transform_3(%arg0: i32, %arg1: i32) -> (i32, i32) {
    %c0_i32 = arith.constant 0 : i32
    %c0_i32_0 = arith.constant 0 : i32
    %c0_i32_1 = arith.constant 0 : i32
    return %c0_i32, %c0_i32_0 : i32, i32
  }
  func.func @transform_4(%arg0: i32, %arg1: i32) -> (i32, i32) {
    %c0_i32 = arith.constant 0 : i32
    %c0_i32_0 = arith.constant 0 : i32
    %c0_i32_1 = arith.constant 0 : i32
    return %c0_i32, %c0_i32_0 : i32, i32
  }
  func.func @transform_5(%arg0: i32, %arg1: i32) -> (i32, i32) {
    %c0_i32 = arith.constant 0 : i32
    %c0_i32_0 = arith.constant 0 : i32
    %c0_i32_1 = arith.constant 0 : i32
    return %c0_i32, %c0_i32_0 : i32, i32
  }
  func.func @transform_6(%arg0: i32, %arg1: i32) -> (i32, i32) {
    %c0_i32 = arith.constant 0 : i32
    %c0_i32_0 = arith.constant 0 : i32
    return %arg0, %c0_i32 : i32, i32
  }
}

module attributes {stable_mosaic.version = 11 : i64} {
  func.func @kernel(%arg0: i32, %arg1: memref<2x8x16xf32, #tpu.memory_space<vmem>>, %arg2: memref<16x32xf32, #tpu.memory_space<vmem>>, %arg3: memref<1x32xf32, #tpu.memory_space<vmem>>, %arg4: memref<32x8xf32, #tpu.memory_space<vmem>>, %arg5: memref<1x8xf32, #tpu.memory_space<vmem>>, %arg6: memref<2x8xf32, #tpu.memory_space<vmem>>) attributes {dimension_semantics = [#tpu.dimension_semantics<arbitrary>], iteration_bounds = array<i64: 1>, scalar_prefetch = 0 : i64, scratch_operands = 0 : i64, tpu.core_type = #tpu.core_type<tc>, window_params = [{pipeline_mode = #tpu.pipeline_mode<synchronous>, transform_indices = @transform_0, window_bounds = array<i64: 2, 8, 16>}, {pipeline_mode = #tpu.pipeline_mode<synchronous>, transform_indices = @transform_1, window_bounds = array<i64: 16, 32>}, {pipeline_mode = #tpu.pipeline_mode<synchronous>, transform_indices = @transform_2, window_bounds = array<i64: 1, 32>}, {pipeline_mode = #tpu.pipeline_mode<synchronous>, transform_indices = @transform_3, window_bounds = array<i64: 32, 8>}, {pipeline_mode = #tpu.pipeline_mode<synchronous>, transform_indices = @transform_4, window_bounds = array<i64: 1, 8>}, {pipeline_mode = #tpu.pipeline_mode<synchronous>, transform_indices = @transform_5, window_bounds = array<i64: 2, 8>}]} {
    %c0 = arith.constant 0 : index
    %c0_0 = arith.constant 0 : index
    %c0_1 = arith.constant 0 : index
    %0 = vector.load %arg1[%c0, %c0_0, %c0_1] : memref<2x8x16xf32, #tpu.memory_space<vmem>>, vector<2x8x16xf32>
    %cst = arith.constant dense<0.000000e+00> : vector<2x16xf32>
    %1 = vector.multi_reduction <add>, %0, %cst [1] : vector<2x8x16xf32> to vector<2x16xf32>
    %c0_2 = arith.constant 0 : index
    %c0_3 = arith.constant 0 : index
    %2 = vector.load %arg2[%c0_2, %c0_3] : memref<16x32xf32, #tpu.memory_space<vmem>>, vector<16x32xf32>
    %cst_4 = arith.constant dense<0.000000e+00> : vector<2x32xf32>
    %3 = tpu.matmul %1, %2, %cst_4 {dimension_numbers = #tpu.dot_dimension_numbers<[1], [0], [0], [1], [0, 0, 1, 1], [], []>} : vector<2x16xf32>, vector<16x32xf32>, vector<2x32xf32> -> vector<2x32xf32>
    %c0_5 = arith.constant 0 : index
    %c0_6 = arith.constant 0 : index
    %4 = vector.load %arg3[%c0_5, %c0_6] : memref<1x32xf32, #tpu.memory_space<vmem>>, vector<1x32xf32>
    %5 = vector.broadcast %4 : vector<1x32xf32> to vector<2x32xf32>
    %6 = arith.addf %3, %5 : vector<2x32xf32>
    %cst_7 = arith.constant 0.000000e+00 : f32
    %7 = vector.broadcast %cst_7 : f32 to vector<2x32xf32>
    %8 = arith.maximumf %6, %7 : vector<2x32xf32>
    %c0_8 = arith.constant 0 : index
    %c0_9 = arith.constant 0 : index
    %9 = vector.load %arg4[%c0_8, %c0_9] : memref<32x8xf32, #tpu.memory_space<vmem>>, vector<32x8xf32>
    %cst_10 = arith.constant dense<0.000000e+00> : vector<2x8xf32>
    %10 = tpu.matmul %8, %9, %cst_10 {dimension_numbers = #tpu.dot_dimension_numbers<[1], [0], [0], [1], [0, 0, 1, 1], [], []>} : vector<2x32xf32>, vector<32x8xf32>, vector<2x8xf32> -> vector<2x8xf32>
    %c0_11 = arith.constant 0 : index
    %c0_12 = arith.constant 0 : index
    %11 = vector.load %arg5[%c0_11, %c0_12] : memref<1x8xf32, #tpu.memory_space<vmem>>, vector<1x8xf32>
    %12 = vector.broadcast %11 : vector<1x8xf32> to vector<2x8xf32>
    %13 = arith.addf %10, %12 : vector<2x8xf32>
    %cst_13 = arith.constant 0.000000e+00 : f32
    %14 = vector.broadcast %cst_13 : f32 to vector<2x8xf32>
    %15 = arith.subf %14, %13 : vector<2x8xf32>
    %16 = math.exp %15 : vector<2x8xf32>
    %cst_14 = arith.constant 1.000000e+00 : f32
    %17 = vector.broadcast %cst_14 : f32 to vector<2x8xf32>
    %18 = arith.addf %17, %16 : vector<2x8xf32>
    %19 = tpu.reciprocal %18 : vector<2x8xf32> -> vector<2x8xf32>
    %c0_15 = arith.constant 0 : index
    %c0_16 = arith.constant 0 : index
    %20 = vector.load %arg6[%c0_15, %c0_16] : memref<2x8xf32, #tpu.memory_space<vmem>>, vector<2x8xf32>
    tpu.vector_store %arg6[%c0_15, %c0_16], %19 {strides = array<i32>} : memref<2x8xf32, #tpu.memory_space<vmem>>, vector<2x8xf32>,
    return
  }
  func.func @transform_0(%arg0: i32) -> (i32, i32, i32) {
    %c0_i32 = arith.constant 0 : i32
    %c0_i32_0 = arith.constant 0 : i32
    %c0_i32_1 = arith.constant 0 : i32
    %c0_i32_2 = arith.constant 0 : i32
    return %c0_i32, %c0_i32_0, %c0_i32_1 : i32, i32, i32
  }
  func.func @transform_1(%arg0: i32) -> (i32, i32) {
    %c0_i32 = arith.constant 0 : i32
    %c0_i32_0 = arith.constant 0 : i32
    %c0_i32_1 = arith.constant 0 : i32
    return %c0_i32, %c0_i32_0 : i32, i32
  }
  func.func @transform_2(%arg0: i32) -> (i32, i32) {
    %c0_i32 = arith.constant 0 : i32
    %c0_i32_0 = arith.constant 0 : i32
    %c0_i32_1 = arith.constant 0 : i32
    return %c0_i32, %c0_i32_0 : i32, i32
  }
  func.func @transform_3(%arg0: i32) -> (i32, i32) {
    %c0_i32 = arith.constant 0 : i32
    %c0_i32_0 = arith.constant 0 : i32
    %c0_i32_1 = arith.constant 0 : i32
    return %c0_i32, %c0_i32_0 : i32, i32
  }
  func.func @transform_4(%arg0: i32) -> (i32, i32) {
    %c0_i32 = arith.constant 0 : i32
    %c0_i32_0 = arith.constant 0 : i32
    %c0_i32_1 = arith.constant 0 : i32
    return %c0_i32, %c0_i32_0 : i32, i32
  }
  func.func @transform_5(%arg0: i32) -> (i32, i32) {
    %c0_i32 = arith.constant 0 : i32
    %c0_i32_0 = arith.constant 0 : i32
    %c0_i32_1 = arith.constant 0 : i32
    return %c0_i32, %c0_i32_0 : i32, i32
  }
}

module attributes {stable_mosaic.version = 11 : i64} {
  func.func @kernel(%arg0: i32, %arg1: i32, %arg2: memref<16x16xi8, #tpu.memory_space<vmem>>, %arg3: memref<16x3xbf16, #tpu.memory_space<vmem>>, %arg4: memref<3x32xf32, #tpu.memory_space<vmem>>, %arg5: memref<1x32xf32, #tpu.memory_space<vmem>>, %arg6: memref<32x16xf32, #tpu.memory_space<vmem>>, %arg7: memref<1x16xf32, #tpu.memory_space<vmem>>, %arg8: memref<16x16xbf16, #tpu.memory_space<vmem>>, %arg9: memref<16x3xf32, #tpu.memory_space<vmem>>) attributes {dimension_semantics = [#tpu.dimension_semantics<parallel>, #tpu.dimension_semantics<arbitrary>], iteration_bounds = array<i64: 1, 1>, scalar_prefetch = 0 : i64, scratch_operands = 1 : i64, tpu.core_type = #tpu.core_type<tc>, window_params = [{transform_indices = @transform_0, window_bounds = array<i64: 16, 16>}, {pipeline_mode = #tpu.pipeline_mode<synchronous>, transform_indices = @transform_1, window_bounds = array<i64: 16, 3>}, {pipeline_mode = #tpu.pipeline_mode<synchronous>, transform_indices = @transform_2, window_bounds = array<i64: 3, 32>}, {pipeline_mode = #tpu.pipeline_mode<synchronous>, transform_indices = @transform_3, window_bounds = array<i64: 1, 32>}, {pipeline_mode = #tpu.pipeline_mode<synchronous>, transform_indices = @transform_4, window_bounds = array<i64: 32, 16>}, {pipeline_mode = #tpu.pipeline_mode<synchronous>, transform_indices = @transform_5, window_bounds = array<i64: 1, 16>}, {transform_indices = @transform_6, window_bounds = array<i64: 16, 16>}]} {
    %c0_i32 = arith.constant 0 : i32
    %0 = arith.cmpi eq, %arg1, %c0_i32 : i32
    %1 = arith.extui %0 : i1 to i32
    %c0_i32_0 = arith.constant 0 : i32
    %2 = arith.cmpi ne, %1, %c0_i32_0 : i32
    scf.if %2 {
      %cst_9 = arith.constant 0.000000e+00 : f32
      %16 = vector.broadcast %cst_9 : f32 to vector<16x3xf32>
      %c0_10 = arith.constant 0 : index
      %c0_11 = arith.constant 0 : index
      %17 = vector.load %arg9[%c0_10, %c0_11] : memref<16x3xf32, #tpu.memory_space<vmem>>, vector<16x3xf32>
      tpu.vector_store %arg9[%c0_10, %c0_11], %16 {strides = array<i32>} : memref<16x3xf32, #tpu.memory_space<vmem>>, vector<16x3xf32>,
    } else {
    }
    %c16_i32 = arith.constant 16 : i32
    %3 = arith.muli %arg1, %c16_i32 : i32
    %4 = tpu.assume_multiple %3, 16 : i32
    %5 = arith.index_cast %4 : i32 to index
    %c0 = arith.constant 0 : index
    %6 = vector.load %arg3[%5, %c0] : memref<16x3xbf16, #tpu.memory_space<vmem>>, vector<16x3xbf16>
    %c0_1 = arith.constant 0 : index
    %c0_2 = arith.constant 0 : index
    %7 = vector.load %arg2[%c0_1, %c0_2] : memref<16x16xi8, #tpu.memory_space<vmem>>, vector<16x16xi8>
    %8 = arith.sitofp %7 : vector<16x16xi8> to vector<16x16xbf16>
    %c0_3 = arith.constant 0 : index
    %c0_4 = arith.constant 0 : index
    %9 = vector.load %arg9[%c0_3, %c0_4] : memref<16x3xf32, #tpu.memory_space<vmem>>, vector<16x3xf32>
    %cst = arith.constant dense<0.000000e+00> : vector<16x3xf32>
    %10 = tpu.matmul %8, %6, %cst {dimension_numbers = #tpu.dot_dimension_numbers<[1], [0], [0], [1], [0, 0, 1, 1], [], []>} : vector<16x16xbf16>, vector<16x3xbf16>, vector<16x3xf32> -> vector<16x3xf32>
    %11 = arith.addf %9, %10 : vector<16x3xf32>
    %c0_5 = arith.constant 0 : index
    %c0_6 = arith.constant 0 : index
    %12 = vector.load %arg9[%c0_5, %c0_6] : memref<16x3xf32, #tpu.memory_space<vmem>>, vector<16x3xf32>
    tpu.vector_store %arg9[%c0_5, %c0_6], %11 {strides = array<i32>} : memref<16x3xf32, #tpu.memory_space<vmem>>, vector<16x3xf32>,
    %c0_i32_7 = arith.constant 0 : i32
    %13 = arith.cmpi eq, %arg1, %c0_i32_7 : i32
    %14 = arith.extui %13 : i1 to i32
    %c0_i32_8 = arith.constant 0 : i32
    %15 = arith.cmpi ne, %14, %c0_i32_8 : i32
    scf.if %15 {
      %c0_9 = arith.constant 0 : index
      %c0_10 = arith.constant 0 : index
      %16 = vector.load %arg9[%c0_9, %c0_10] : memref<16x3xf32, #tpu.memory_space<vmem>>, vector<16x3xf32>
      %c0_11 = arith.constant 0 : index
      %c0_12 = arith.constant 0 : index
      %17 = vector.load %arg4[%c0_11, %c0_12] : memref<3x32xf32, #tpu.memory_space<vmem>>, vector<3x32xf32>
      %18 = vector.extract_strided_slice %16 {offsets = [0, 0], sizes = [16, 1], strides = [1, 1]} : vector<16x3xf32> to vector<16x1xf32>
      %19 = vector.extract_strided_slice %17 {offsets = [0, 0], sizes = [1, 32], strides = [1, 1]} : vector<3x32xf32> to vector<1x32xf32>
      %20 = vector.broadcast %18 : vector<16x1xf32> to vector<16x32xf32>
      %21 = vector.broadcast %19 : vector<1x32xf32> to vector<16x32xf32>
      %22 = arith.mulf %20, %21 : vector<16x32xf32>
      %23 = vector.extract_strided_slice %16 {offsets = [0, 1], sizes = [16, 1], strides = [1, 1]} : vector<16x3xf32> to vector<16x1xf32>
      %24 = vector.extract_strided_slice %17 {offsets = [1, 0], sizes = [1, 32], strides = [1, 1]} : vector<3x32xf32> to vector<1x32xf32>
      %25 = vector.broadcast %23 : vector<16x1xf32> to vector<16x32xf32>
      %26 = vector.broadcast %24 : vector<1x32xf32> to vector<16x32xf32>
      %27 = arith.mulf %25, %26 : vector<16x32xf32>
      %28 = arith.addf %22, %27 : vector<16x32xf32>
      %29 = vector.extract_strided_slice %16 {offsets = [0, 2], sizes = [16, 1], strides = [1, 1]} : vector<16x3xf32> to vector<16x1xf32>
      %30 = vector.extract_strided_slice %17 {offsets = [2, 0], sizes = [1, 32], strides = [1, 1]} : vector<3x32xf32> to vector<1x32xf32>
      %31 = vector.broadcast %29 : vector<16x1xf32> to vector<16x32xf32>
      %32 = vector.broadcast %30 : vector<1x32xf32> to vector<16x32xf32>
      %33 = arith.mulf %31, %32 : vector<16x32xf32>
      %34 = arith.addf %28, %33 : vector<16x32xf32>
      %c0_13 = arith.constant 0 : index
      %c0_14 = arith.constant 0 : index
      %35 = vector.load %arg5[%c0_13, %c0_14] : memref<1x32xf32, #tpu.memory_space<vmem>>, vector<1x32xf32>
      %36 = vector.broadcast %35 : vector<1x32xf32> to vector<16x32xf32>
      %37 = arith.addf %34, %36 : vector<16x32xf32>
      %cst_15 = arith.constant 0.000000e+00 : f32
      %38 = vector.broadcast %cst_15 : f32 to vector<16x32xf32>
      %39 = arith.maximumf %37, %38 : vector<16x32xf32>
      %c0_16 = arith.constant 0 : index
      %c0_17 = arith.constant 0 : index
      %40 = vector.load %arg6[%c0_16, %c0_17] : memref<32x16xf32, #tpu.memory_space<vmem>>, vector<32x16xf32>
      %cst_18 = arith.constant dense<0.000000e+00> : vector<16x16xf32>
      %41 = tpu.matmul %39, %40, %cst_18 {dimension_numbers = #tpu.dot_dimension_numbers<[1], [0], [0], [1], [0, 0, 1, 1], [], []>} : vector<16x32xf32>, vector<32x16xf32>, vector<16x16xf32> -> vector<16x16xf32>
      %c0_19 = arith.constant 0 : index
      %c0_20 = arith.constant 0 : index
      %42 = vector.load %arg7[%c0_19, %c0_20] : memref<1x16xf32, #tpu.memory_space<vmem>>, vector<1x16xf32>
      %43 = vector.broadcast %42 : vector<1x16xf32> to vector<16x16xf32>
      %44 = arith.addf %41, %43 : vector<16x16xf32>
      %cst_21 = arith.constant 0.000000e+00 : f32
      %45 = vector.broadcast %cst_21 : f32 to vector<16x16xf32>
      %46 = arith.maximumf %44, %45 : vector<16x16xf32>
      %47 = arith.truncf %46 : vector<16x16xf32> to vector<16x16xbf16>
      %c0_22 = arith.constant 0 : index
      %c0_23 = arith.constant 0 : index
      %48 = vector.load %arg8[%c0_22, %c0_23] : memref<16x16xbf16, #tpu.memory_space<vmem>>, vector<16x16xbf16>
      tpu.vector_store %arg8[%c0_22, %c0_23], %47 {strides = array<i32>} : memref<16x16xbf16, #tpu.memory_space<vmem>>, vector<16x16xbf16>,
    } else {
    }
    return
  }
  func.func @transform_0(%arg0: i32, %arg1: i32) -> (i32, i32) {
    %c0_i32 = arith.constant 0 : i32
    return %arg0, %arg1 : i32, i32
  }
  func.func @transform_1(%arg0: i32, %arg1: i32) -> (i32, i32) {
    %c0_i32 = arith.constant 0 : i32
    %c0_i32_0 = arith.constant 0 : i32
    %c0_i32_1 = arith.constant 0 : i32
    return %c0_i32, %c0_i32_0 : i32, i32
  }
  func.func @transform_2(%arg0: i32, %arg1: i32) -> (i32, i32) {
    %c0_i32 = arith.constant 0 : i32
    %c0_i32_0 = arith.constant 0 : i32
    %c0_i32_1 = arith.constant 0 : i32
    return %c0_i32, %c0_i32_0 : i32, i32
  }
  func.func @transform_3(%arg0: i32, %arg1: i32) -> (i32, i32) {
    %c0_i32 = arith.constant 0 : i32
    %c0_i32_0 = arith.constant 0 : i32
    %c0_i32_1 = arith.constant 0 : i32
    return %c0_i32, %c0_i32_0 : i32, i32
  }
  func.func @transform_4(%arg0: i32, %arg1: i32) -> (i32, i32) {
    %c0_i32 = arith.constant 0 : i32
    %c0_i32_0 = arith.constant 0 : i32
    %c0_i32_1 = arith.constant 0 : i32
    return %c0_i32, %c0_i32_0 : i32, i32
  }
  func.func @transform_5(%arg0: i32, %arg1: i32) -> (i32, i32) {
    %c0_i32 = arith.constant 0 : i32
    %c0_i32_0 = arith.constant 0 : i32
    %c0_i32_1 = arith.constant 0 : i32
    return %c0_i32, %c0_i32_0 : i32, i32
  }
  func.func @transform_6(%arg0: i32, %arg1: i32) -> (i32, i32) {
    %c0_i32 = arith.constant 0 : i32
    %c0_i32_0 = arith.constant 0 : i32
    return %arg0, %c0_i32 : i32, i32
  }
}

</mosaic_0001>

<llo_original>
// kernel: gin_critic_forward.5
$region0: #{gin_critic_forward.5}
  #allocation0 [shape = 'u32[]', space=smem, size = 0x4, offset = 0x4, fixed_abs, tag = 'smem constant byte address 0x4 - core index']
  #allocation1 [shape = 'u32[144,128]{1,0:T(1,128)}', space=vmem, size = 0x12000, scoped, tag = 'internal scratch']
  %s0 = inlined_call_operand.vmem [shape: f32[2,8,16], index: 0, kind: input, shape index: {}]
  %s1 = inlined_call_operand.vmem [shape: f32[16,32], index: 1, kind: input, shape index: {}]
  %s2 = inlined_call_operand.vmem [shape: f32[1,32], index: 2, kind: input, shape index: {}]
  %s3 = inlined_call_operand.vmem [shape: f32[32,8], index: 3, kind: input, shape index: {}]
  %s4 = inlined_call_operand.vmem [shape: f32[1,8], index: 4, kind: input, shape index: {}]
  %s5 = inlined_call_operand.hbm [shape: f32[2,8], index: 5, kind: output, shape index: {}]
  %s6 = sld [smem:[#allocation0]]
  $region30: #{gin_critic_forward.5} parent=0
    _
  %s8 = ssub.s32 1, %s6
  %s9 = scalar_select 0, %s8, %s6
  $region1: #{gin_critic_forward.5} parent=0
    #allocation2 [shape = 'u8[1024]{0}', space=vmem, size = 0x400, scoped, tag = 'output window, operand 0, single buffered']
    #allocation3 [shape = 's32[1]{0}', space=sflag, size = 0x4, scoped, tag = 'scoped memory for gin_critic_forward.5']
    %10 = vsyncpa [#allocation3], 0
    // Predicated region
    $region2: #{gin_critic_forward.5} parent=1 // pred_check
      _
    $region3: #{gin_critic_forward.5} parent=1 // pred_check_branch
      %12 = sbr.rel (0) target = $region5
    $region4: #{gin_critic_forward.5} parent=1 // pred_region
      _
    $region5: #{gin_critic_forward.5} parent=1 // pred_fallthru
      _
    // Predicated region
    $region6: #{gin_critic_forward.5} parent=1 // pred_check
      _
    $region7: #{gin_critic_forward.5} parent=1 // pred_check_branch
      %14 = sbr.rel (0) target = $region9
    $region8: #{gin_critic_forward.5} parent=1 // pred_region
      _
    $region9: #{gin_critic_forward.5} parent=1 // pred_fallthru
      _
    // Predicated region
    $region10: #{gin_critic_forward.5} parent=1 // pred_check
      _
    $region11: #{gin_critic_forward.5} parent=1 // pred_check_branch
      %16 = sbr.rel (0) target = $region13
    $region12: #{gin_critic_forward.5} parent=1 // pred_region
      _
    $region13: #{gin_critic_forward.5} parent=1 // pred_fallthru
      _
    // Predicated region
    $region14: #{gin_critic_forward.5} parent=1 // pred_check
      _
    $region15: #{gin_critic_forward.5} parent=1 // pred_check_branch
      %18 = sbr.rel (0) target = $region17
    $region16: #{gin_critic_forward.5} parent=1 // pred_region
      _
    $region17: #{gin_critic_forward.5} parent=1 // pred_fallthru
      _
    // Predicated region
    $region18: #{gin_critic_forward.5} parent=1 // pred_check
      _
    $region19: #{gin_critic_forward.5} parent=1 // pred_check_branch
      %20 = sbr.rel (0) target = $region21
    $region20: #{gin_critic_forward.5} parent=1 // pred_region
      _
    $region21: #{gin_critic_forward.5} parent=1 // pred_fallthru
      _
    %v21 = vld [vmem:[%s0] sm:$0xff]
    %v22 = vld [vmem:[%s0 + $0x8] sm:$0xff]
    %vm23 = vcmask 130048
    %v24 = vsel %vm23, %v21, 0.0
    %v25 = vrot.slane %v24, 4
    %v26 = vadd.f32 %v24, %v25
    %v27 = vrot.slane %v26, 2
    %v28 = vadd.f32 %v26, %v27
    %v29 = vrot.slane %v28, 1
    %v30 = vadd.f32 %v28, %v29
    %v31 = vsel %vm23, %v22, 0.0
    %v32 = vrot.slane %v31, 4
    %v33 = vadd.f32 %v31, %v32
    %v34 = vrot.slane %v33, 2
    %v35 = vadd.f32 %v33, %v34
    %v36 = vrot.slane %v35, 1
    %v37 = vadd.f32 %v35, %v36
    %v38 = vld [vmem:[%s1] sm:$0xff]
    %v39 = vld [vmem:[%s1 + $0x8] sm:$0xff]
    %v40 = vld [vmem:[%s2] sm:$0x1]
    %v42 = vlaneseq
    %v43 = vshrl.u32 %v42, 7
    %v44 = vsub.s32 0, %v43
    %v45 = vrot.slane %v40, %v44
    %vm49 = vcmask 1041409
    %v50 = vsel %vm49, %v37, %v30
    %v51 = vsel %vm23, %v50, 0
    %53 = vmatprep.subr.mxu0 0.0
    %54 = vmatpush1.msra.mxu0 0.0
    %55 = vmatprep.subr.mxu0 0.0
    %56 = vmatpush1.msra.mxu0 0.0
    %57 = vmatprep.subr.mxu0 0.0
    %58 = vmatpush1.msra.mxu0 0.0
    %59 = vmatprep.subr.mxu0 0.0
    %60 = vmatpush1.msra.mxu0 0.0
    %61 = vmatprep.subr.mxu0 0.0
    %62 = vmatpush1.msra.mxu0 0.0
    %63 = vmatprep.subr.mxu0 0.0
    %64 = vmatpush1.msra.mxu0 0.0
    %65 = vmatprep.subr.mxu0 0.0
    %66 = vmatpush1.msra.mxu0 0.0
    %67 = vmatprep.subr.mxu0 0.0
    %68 = vmatpush1.msra.mxu0 0.0
    %69 = vmatprep.subr.mxu0 0.0
    %70 = vmatpush1.msra.mxu0 0.0
    %71 = vmatprep.subr.mxu0 0.0
    %72 = vmatpush1.msra.mxu0 0.0
    %73 = vmatprep.subr.mxu0 0.0
    %74 = vmatpush1.msra.mxu0 0.0
    %75 = vmatprep.subr.mxu0 0.0
    %76 = vmatpush1.msra.mxu0 0.0
    %77 = vmatprep.subr.mxu0 0.0
    %78 = vmatpush1.msra.mxu0 0.0
    %79 = vmatprep.subr.mxu0 0.0
    %80 = vmatpush1.msra.mxu0 0.0
    %81 = vmatprep.subr.mxu0 0.0
    %82 = vmatpush1.msra.mxu0 %v39
    %83 = vmatprep.subr.mxu0 0.0
    %84 = vmatpush1.msra.mxu0 %v38
    %85 = vmatprep.subr.mxu0 0.0
    %86 = vmatpush2.msra.mxu0 0.0
    %87 = vmatprep.subr.mxu0 0.0
    %88 = vmatpush2.msra.mxu0 0.0
    %89 = vmatprep.subr.mxu0 0.0
    %90 = vmatpush2.msra.mxu0 0.0
    %91 = vmatprep.subr.mxu0 0.0
    %92 = vmatpush2.msra.mxu0 0.0
    %93 = vmatprep.subr.mxu0 0.0
    %94 = vmatpush2.msra.mxu0 0.0
    %95 = vmatprep.subr.mxu0 0.0
    %96 = vmatpush2.msra.mxu0 0.0
    %97 = vmatprep.subr.mxu0 0.0
    %98 = vmatpush2.msra.mxu0 0.0
    %99 = vmatprep.subr.mxu0 0.0
    %100 = vmatpush2.msra.mxu0 0.0
    %101 = vmatprep.subr.mxu0 0.0
    %102 = vmatpush2.msra.mxu0 0.0
    %103 = vmatprep.subr.mxu0 0.0
    %104 = vmatpush2.msra.mxu0 0.0
    %105 = vmatprep.subr.mxu0 0.0
    %106 = vmatpush2.msra.mxu0 0.0
    %107 = vmatprep.subr.mxu0 0.0
    %108 = vmatpush2.msra.mxu0 0.0
    %109 = vmatprep.subr.mxu0 0.0
    %110 = vmatpush2.msra.mxu0 0.0
    %111 = vmatprep.subr.mxu0 0.0
    %112 = vmatpush2.msra.mxu0 0.0
    %113 = vmatprep.subr.mxu0 0.0
    %114 = vmatpush2.msra.mxu0 0.0
    %115 = vmatprep.subr.mxu0 0.0
    %116 = vmatpush2.msra.mxu0 0.0
    %117 = vmatprep.mubr.f32.mxu0 0.0
    %118 = vmatmul.mubr.f32.gmra.mxu0 %v51
    %v119 = vpop.f32.mrf.mxu0
    %v120 = vadd.f32 %v45, %v119
    %v121 = vpop.f32.mrf.mxu0
    %122 = vdwg.mxu0
    %v123 = vmax.f32 %v120, 0.0
    %v124 = vld [vmem:[%s3] sm:$0xff]
    %v125 = vld [vmem:[%s3 + $0x8] sm:$0xff]
    %v126 = vld [vmem:[%s3 + $0x10] sm:$0xff]
    %v127 = vld [vmem:[%s3 + $0x18] sm:$0xff]
    %v128 = vld [vmem:[%s4] sm:$0x1]
    %v130 = vlaneseq
    %v131 = vshrl.u32 %v130, 7
    %v132 = vsub.s32 0, %v131
    %v133 = vrot.slane %v128, %v132
    %vm135 = vcmask 261120
    %v137 = vsel %vm135, %v123, 0
    %139 = vmatprep.subr.mxu0 0.0
    %140 = vmatpush1.msra.mxu0 0.0
    %141 = vmatprep.subr.mxu0 0.0
    %142 = vmatpush1.msra.mxu0 0.0
    %143 = vmatprep.subr.mxu0 0.0
    %144 = vmatpush1.msra.mxu0 0.0
    %145 = vmatprep.subr.mxu0 0.0
    %146 = vmatpush1.msra.mxu0 0.0
    %147 = vmatprep.subr.mxu0 0.0
    %148 = vmatpush1.msra.mxu0 0.0
    %149 = vmatprep.subr.mxu0 0.0
    %150 = vmatpush1.msra.mxu0 0.0
    %151 = vmatprep.subr.mxu0 0.0
    %152 = vmatpush1.msra.mxu0 0.0
    %153 = vmatprep.subr.mxu0 0.0
    %154 = vmatpush1.msra.mxu0 0.0
    %155 = vmatprep.subr.mxu0 0.0
    %156 = vmatpush1.msra.mxu0 0.0
    %157 = vmatprep.subr.mxu0 0.0
    %158 = vmatpush1.msra.mxu0 0.0
    %159 = vmatprep.subr.mxu0 0.0
    %160 = vmatpush1.msra.mxu0 0.0
    %161 = vmatprep.subr.mxu0 0.0
    %162 = vmatpush1.msra.mxu0 0.0
    %163 = vmatprep.subr.mxu0 0.0
    %164 = vmatpush1.msra.mxu0 %v127
    %165 = vmatprep.subr.mxu0 0.0
    %166 = vmatpush1.msra.mxu0 %v126
    %167 = vmatprep.subr.mxu0 0.0
    %168 = vmatpush1.msra.mxu0 %v125
    %169 = vmatprep.subr.mxu0 0.0
    %170 = vmatpush1.msra.mxu0 %v124
    %171 = vmatprep.subr.mxu0 0.0
    %172 = vmatpush2.msra.mxu0 0.0
    %173 = vmatprep.subr.mxu0 0.0
    %174 = vmatpush2.msra.mxu0 0.0
    %175 = vmatprep.subr.mxu0 0.0
    %176 = vmatpush2.msra.mxu0 0.0
    %177 = vmatprep.subr.mxu0 0.0
    %178 = vmatpush2.msra.mxu0 0.0
    %179 = vmatprep.subr.mxu0 0.0
    %180 = vmatpush2.msra.mxu0 0.0
    %181 = vmatprep.subr.mxu0 0.0
    %182 = vmatpush2.msra.mxu0 0.0
    %183 = vmatprep.subr.mxu0 0.0
    %184 = vmatpush2.msra.mxu0 0.0
    %185 = vmatprep.subr.mxu0 0.0
    %186 = vmatpush2.msra.mxu0 0.0
    %187 = vmatprep.subr.mxu0 0.0
    %188 = vmatpush2.msra.mxu0 0.0
    %189 = vmatprep.subr.mxu0 0.0
    %190 = vmatpush2.msra.mxu0 0.0
    %191 = vmatprep.subr.mxu0 0.0
    %192 = vmatpush2.msra.mxu0 0.0
    %193 = vmatprep.subr.mxu0 0.0
    %194 = vmatpush2.msra.mxu0 0.0
    %195 = vmatprep.subr.mxu0 0.0
    %196 = vmatpush2.msra.mxu0 0.0
    %197 = vmatprep.subr.mxu0 0.0
    %198 = vmatpush2.msra.mxu0 0.0
    %199 = vmatprep.subr.mxu0 0.0
    %200 = vmatpush2.msra.mxu0 0.0
    %201 = vmatprep.subr.mxu0 0.0
    %202 = vmatpush2.msra.mxu0 0.0
    %203 = vmatprep.mubr.f32.mxu0 0.0
    %204 = vmatmul.mubr.f32.gmra.mxu0 %v137
    %v205 = vpop.f32.mrf.mxu0
    %v206 = vadd.f32 %v133, %v205
    %v207 = vpop.f32.mrf.mxu0
    %208 = vdwg.mxu0
    %v209 = vsub.f32 0.0, %v206
    %v210 = vmul.f32 %v209, 1.442695
    %v211 = vpow.pop %v210
    %v212 = vadd.f32 %v211, 1.0
    %v213 = vrcp.pop %v212
    %vm214 = vcmask 58368
    %215 = vst.msk [vmem:[#allocation2] sm:$0x3] %vm214, %v213
    // Predicated region
    $region22: #{gin_critic_forward.5} parent=1 // pred_check
      _
    $region23: #{gin_critic_forward.5} parent=1 // pred_check_branch
      %217 = sbr.rel (0) target = $region25
    $region24: #{gin_critic_forward.5} parent=1 // pred_region
      %s219 = ssub.s32 32, 32
      %220 = vsyncadd [#allocation3], %s219
      %s222 = sshll.u32 [#allocation2], 4
      %s223 = int_to_ptr.vmem [resolvable:$true] %s222
      %225 = dma.vmem_to_hbm [thread:$0]  %s223, 32, %s5, [#allocation3]
    $region25: #{gin_critic_forward.5} parent=1 // pred_fallthru
      _
    // Predicated region
    $region26: #{gin_critic_forward.5} parent=1 // pred_check
      _
    $region27: #{gin_critic_forward.5} parent=1 // pred_check_branch
      %227 = sbr.rel (0) target = $region29
    $region28: #{gin_critic_forward.5} parent=1 // pred_region
      %228 = dma.done [#allocation3], 32
    $region29: #{gin_critic_forward.5} parent=1 // pred_fallthru
      _
    %229 = vsyncpa [#allocation3], 1

// kernel: gin_critic_forward.4
$region0: #{gin_critic_forward.4}
  #allocation0 [shape = 'u32[]', space=smem, size = 0x4, offset = 0x4, fixed_abs, tag = 'smem constant byte address 0x4 - core index']
  #allocation1 [shape = 'u32[144,128]{1,0:T(1,128)}', space=vmem, size = 0x12000, scoped, tag = 'internal scratch']
  #allocation2 [shape = 'f32[16,16]{1,0:T(8,128)}', space=vmem, size = 0x2000, scoped, tag = 'scratch operand']
  %s0 = inlined_call_operand.vmem [shape: s8[16,16], index: 0, kind: input, shape index: {}]
  %s1 = inlined_call_operand.vmem [shape: bf16[16,16], index: 1, kind: input, shape index: {}]
  %s2 = inlined_call_operand.vmem [shape: f32[16,32], index: 2, kind: input, shape index: {}]
  %s3 = inlined_call_operand.vmem [shape: f32[1,32], index: 3, kind: input, shape index: {}]
  %s4 = inlined_call_operand.vmem [shape: f32[32,16], index: 4, kind: input, shape index: {}]
  %s5 = inlined_call_operand.vmem [shape: f32[1,16], index: 5, kind: input, shape index: {}]
  %s6 = inlined_call_operand.vmem [shape: f32[16,16], index: 6, kind: output, shape index: {}]
  %s7 = sld [smem:[#allocation0]]
  $region42: #{gin_critic_forward.4} parent=0
    _
  %s9 = ssub.s32 1, %s7
  %s10 = scalar_select 0, %s9, %s7
  // Predicated region
  $region2: #{gin_critic_forward.4} parent=0 // pred_check
    _
  $region3: #{gin_critic_forward.4} parent=0 // pred_check_branch
    %12 = sbr.rel (0) target = $region5
  $region4: #{gin_critic_forward.4} parent=0 // pred_region
    _
  $region5: #{gin_critic_forward.4} parent=0 // pred_fallthru
    _
  // Predicated region
  $region6: #{gin_critic_forward.4} parent=0 // pred_check
    _
  $region7: #{gin_critic_forward.4} parent=0 // pred_check_branch
    %14 = sbr.rel (0) target = $region9
  $region8: #{gin_critic_forward.4} parent=0 // pred_region
    _
  $region9: #{gin_critic_forward.4} parent=0 // pred_fallthru
    _
  // Predicated region
  $region10: #{gin_critic_forward.4} parent=0 // pred_check
    _
  $region11: #{gin_critic_forward.4} parent=0 // pred_check_branch
    %16 = sbr.rel (0) target = $region13
  $region12: #{gin_critic_forward.4} parent=0 // pred_region
    _
  $region13: #{gin_critic_forward.4} parent=0 // pred_fallthru
    _
  // Predicated region
  $region14: #{gin_critic_forward.4} parent=0 // pred_check
    _
  $region15: #{gin_critic_forward.4} parent=0 // pred_check_branch
    %18 = sbr.rel (0) target = $region17
  $region16: #{gin_critic_forward.4} parent=0 // pred_region
    _
  $region17: #{gin_critic_forward.4} parent=0 // pred_fallthru
    _
  // Predicated region
  $region18: #{gin_critic_forward.4} parent=0 // pred_check
    _
  $region19: #{gin_critic_forward.4} parent=0 // pred_check_branch
    %20 = sbr.rel (0) target = $region21
  $region20: #{gin_critic_forward.4} parent=0 // pred_region
    _
  $region21: #{gin_critic_forward.4} parent=0 // pred_fallthru
    _
  // Predicated region
  $region22: #{gin_critic_forward.4} parent=0 // pred_check
    _
  $region23: #{gin_critic_forward.4} parent=0 // pred_check_branch
    %22 = sbr.rel (0) target = $region25
  $region24: #{gin_critic_forward.4} parent=0 // pred_region
    _
  $region25: #{gin_critic_forward.4} parent=0 // pred_fallthru
    _
  %p24 = scmp.eq.s32.totalorder 0, 0
  // Predicated region
  $region26: #{gin_critic_forward.4} parent=0 // pred_check
    %p25 = pneg %p24
  $region27: #{gin_critic_forward.4} parent=0 // pred_check_branch
    %27 = sbr.rel (%p25) target = $region29
  $region28: #{gin_critic_forward.4} parent=0 // pred_region
    %vm28 = vcmask 130048
    %29 = vst.msk [vmem:[#allocation2] sm:$0xff] %vm28, 0.0
    %30 = vst.msk [vmem:[#allocation2 + $0x8] sm:$0xff] %vm28, 0.0
  $region29: #{gin_critic_forward.4} parent=0 // pred_fallthru
    _
  %s31 = smul.u32 0, 16
  %s32 = sshra.s32 %s31, 3
  %s33 = sand.u32 %s31, 7
  %s34 = smul.addr %s32, 4
  %s35 = scalar_lea.vmem %s1, %s34
  %v36 = vld [vmem:[%s35] sm:$0xf]
  %v37 = vld [vmem:[%s35 + $0x4] sm:$0xf]
  %v38 = vld [vmem:[%s0] sm:$0x3]
  %v39 = vld [vmem:[%s0 + $0x2] sm:$0x3]
  %v40 = vunpack.c.l.s8.bf16 %v38
  %v41 = vunpack.c.l.s8.bf16 %v39
  %v42 = vld [vmem:[#allocation2] sm:$0xff]
  %v43 = vld [vmem:[#allocation2 + $0x8] sm:$0xff]
  %v46 = vunpack.c.l.b16 %v40
  %v47 = vunpack.c.l.b16 %v41
  %v48 = vpack.c.b16 %v47, %v46
  %v51 = vunpack.c.l.b16 %v36
  %v52 = vunpack.c.l.b16 %v37
  %v53 = vpack.c.b16 %v52, %v51
  %vm55 = vcmask 130048
  %v57 = vsel %vm55, %v48, 0
  %59 = vmatprep.subr.bf16.mxu0 0
  %60 = vmatpush1.bf16.msra.mxu0 0
  %61 = vmatprep.subr.bf16.mxu0 0
  %62 = vmatpush1.bf16.msra.mxu0 0
  %63 = vmatprep.subr.bf16.mxu0 0
  %64 = vmatpush1.bf16.msra.mxu0 0
  %65 = vmatprep.subr.bf16.mxu0 0
  %66 = vmatpush1.bf16.msra.mxu0 0
  %67 = vmatprep.subr.bf16.mxu0 0
  %68 = vmatpush1.bf16.msra.mxu0 0
  %69 = vmatprep.subr.bf16.mxu0 0
  %70 = vmatpush1.bf16.msra.mxu0 0
  %71 = vmatprep.subr.bf16.mxu0 0
  %72 = vmatpush1.bf16.msra.mxu0 0
  %73 = vmatprep.subr.bf16.mxu0 0
  %74 = vmatpush1.bf16.msra.mxu0 %v53
  %75 = vmatprep.subr.bf16.mxu0 0
  %76 = vmatpush2.bf16.msra.mxu0 0
  %77 = vmatprep.subr.bf16.mxu0 0
  %78 = vmatpush2.bf16.msra.mxu0 0
  %79 = vmatprep.subr.bf16.mxu0 0
  %80 = vmatpush2.bf16.msra.mxu0 0
  %81 = vmatprep.subr.bf16.mxu0 0
  %82 = vmatpush2.bf16.msra.mxu0 0
  %83 = vmatprep.subr.bf16.mxu0 0
  %84 = vmatpush2.bf16.msra.mxu0 0
  %85 = vmatprep.subr.bf16.mxu0 0
  %86 = vmatpush2.bf16.msra.mxu0 0
  %87 = vmatprep.subr.bf16.mxu0 0
  %88 = vmatpush2.bf16.msra.mxu0 0
  %89 = vmatprep.subr.bf16.mxu0 0
  %90 = vmatpush2.bf16.msra.mxu0 0
  %91 = vmatprep.mubr.bf16.mxu0 0
  %92 = vmatmul.mubr.bf16.gmra.mxu0 %v57
  %v93 = vpop.f32.mrf.mxu0
  %v94 = vadd.f32 0.0, %v93
  %v95 = vpop.f32.mrf.mxu0
  %v96 = vpop.f32.mrf.mxu0
  %v97 = vadd.f32 0.0, %v96
  %v98 = vpop.f32.mrf.mxu0
  %99 = vdwg.mxu0
  %v100 = vadd.f32 %v42, %v94
  %v101 = vadd.f32 %v43, %v97
  %102 = vst.msk [vmem:[#allocation2] sm:$0xff] %vm55, %v100
  %103 = vst.msk [vmem:[#allocation2 + $0x8] sm:$0xff] %vm55, %v101
  // Predicated region
  $region30: #{gin_critic_forward.4} parent=0 // pred_check
    %p104 = pneg %p24
  $region31: #{gin_critic_forward.4} parent=0 // pred_check_branch
    %106 = sbr.rel (%p104) target = $region33
  $region32: #{gin_critic_forward.4} parent=0 // pred_region
    %v107 = vld [vmem:[#allocation2] sm:$0xff]
    %v108 = vld [vmem:[#allocation2 + $0x8] sm:$0xff]
    %v109 = vld [vmem:[%s2] sm:$0xff]
    %v110 = vld [vmem:[%s2 + $0x8] sm:$0xff]
    %v111 = vld [vmem:[%s3] sm:$0x1]
    %v113 = vlaneseq
    %v114 = vshrl.u32 %v113, 7
    %v115 = vsub.s32 0, %v114
    %v116 = vrot.slane %v111, %v115
    %v119 = vsel %vm55, %v107, 0
    %v122 = vsel %vm55, %v108, 0
    %124 = vmatprep.subr.mxu0 0.0
    %125 = vmatpush1.msra.mxu0 0.0
    %126 = vmatprep.subr.mxu0 0.0
    %127 = vmatpush1.msra.mxu0 0.0
    %128 = vmatprep.subr.mxu0 0.0
    %129 = vmatpush1.msra.mxu0 0.0
    %130 = vmatprep.subr.mxu0 0.0
    %131 = vmatpush1.msra.mxu0 0.0
    %132 = vmatprep.subr.mxu0 0.0
    %133 = vmatpush1.msra.mxu0 0.0
    %134 = vmatprep.subr.mxu0 0.0
    %135 = vmatpush1.msra.mxu0 0.0
    %136 = vmatprep.subr.mxu0 0.0
    %137 = vmatpush1.msra.mxu0 0.0
    %138 = vmatprep.subr.mxu0 0.0
    %139 = vmatpush1.msra.mxu0 0.0
    %140 = vmatprep.subr.mxu0 0.0
    %141 = vmatpush1.msra.mxu0 0.0
    %142 = vmatprep.subr.mxu0 0.0
    %143 = vmatpush1.msra.mxu0 0.0
    %144 = vmatprep.subr.mxu0 0.0
    %145 = vmatpush1.msra.mxu0 0.0
    %146 = vmatprep.subr.mxu0 0.0
    %147 = vmatpush1.msra.mxu0 0.0
    %148 = vmatprep.subr.mxu0 0.0
    %149 = vmatpush1.msra.mxu0 0.0
    %150 = vmatprep.subr.mxu0 0.0
    %151 = vmatpush1.msra.mxu0 0.0
    %152 = vmatprep.subr.mxu0 0.0
    %153 = vmatpush1.msra.mxu0 %v110
    %154 = vmatprep.subr.mxu0 0.0
    %155 = vmatpush1.msra.mxu0 %v109
    %156 = vmatprep.subr.mxu0 0.0
    %157 = vmatpush2.msra.mxu0 0.0
    %158 = vmatprep.subr.mxu0 0.0
    %159 = vmatpush2.msra.mxu0 0.0
    %160 = vmatprep.subr.mxu0 0.0
    %161 = vmatpush2.msra.mxu0 0.0
    %162 = vmatprep.subr.mxu0 0.0
    %163 = vmatpush2.msra.mxu0 0.0
    %164 = vmatprep.subr.mxu0 0.0
    %165 = vmatpush2.msra.mxu0 0.0
    %166 = vmatprep.subr.mxu0 0.0
    %167 = vmatpush2.msra.mxu0 0.0
    %168 = vmatprep.subr.mxu0 0.0
    %169 = vmatpush2.msra.mxu0 0.0
    %170 = vmatprep.subr.mxu0 0.0
    %171 = vmatpush2.msra.mxu0 0.0
    %172 = vmatprep.subr.mxu0 0.0
    %173 = vmatpush2.msra.mxu0 0.0
    %174 = vmatprep.subr.mxu0 0.0
    %175 = vmatpush2.msra.mxu0 0.0
    %176 = vmatprep.subr.mxu0 0.0
    %177 = vmatpush2.msra.mxu0 0.0
    %178 = vmatprep.subr.mxu0 0.0
    %179 = vmatpush2.msra.mxu0 0.0
    %180 = vmatprep.subr.mxu0 0.0
    %181 = vmatpush2.msra.mxu0 0.0
    %182 = vmatprep.subr.mxu0 0.0
    %183 = vmatpush2.msra.mxu0 0.0
    %184 = vmatprep.subr.mxu0 0.0
    %185 = vmatpush2.msra.mxu0 0.0
    %186 = vmatprep.subr.mxu0 0.0
    %187 = vmatpush2.msra.mxu0 0.0
    %188 = vmatprep.mubr.f32.mxu0 0.0
    %189 = vmatmul.mubr.f32.gmra.mxu0 %v119
    %v190 = vpop.f32.mrf.mxu0
    %v191 = vadd.f32 %v116, %v190
    %v192 = vpop.f32.mrf.mxu0
    %193 = vmatprep.mubr.f32.mxu0 0.0
    %194 = vmatmul.mubr.f32.gmra.mxu0 %v122
    %v195 = vpop.f32.mrf.mxu0
    %v196 = vadd.f32 %v116, %v195
    %v197 = vpop.f32.mrf.mxu0
    %198 = vdwg.mxu0
    %v199 = vmax.f32 %v191, 0.0
    %v200 = vmax.f32 %v196, 0.0
    %v201 = vld [vmem:[%s4] sm:$0xff]
    %v202 = vld [vmem:[%s4 + $0x8] sm:$0xff]
    %v203 = vld [vmem:[%s4 + $0x10] sm:$0xff]
    %v204 = vld [vmem:[%s4 + $0x18] sm:$0xff]
    %v205 = vld [vmem:[%s5] sm:$0x1]
    %v207 = vlaneseq
    %v208 = vshrl.u32 %v207, 7
    %v209 = vsub.s32 0, %v208
    %v210 = vrot.slane %v205, %v209
    %vm212 = vcmask 261120
    %v214 = vsel %vm212, %v199, 0
    %v217 = vsel %vm212, %v200, 0
    %219 = vmatprep.subr.mxu0 0.0
    %220 = vmatpush1.msra.mxu0 0.0
    %221 = vmatprep.subr.mxu0 0.0
    %222 = vmatpush1.msra.mxu0 0.0
    %223 = vmatprep.subr.mxu0 0.0
    %224 = vmatpush1.msra.mxu0 0.0
    %225 = vmatprep.subr.mxu0 0.0
    %226 = vmatpush1.msra.mxu0 0.0
    %227 = vmatprep.subr.mxu0 0.0
    %228 = vmatpush1.msra.mxu0 0.0
    %229 = vmatprep.subr.mxu0 0.0
    %230 = vmatpush1.msra.mxu0 0.0
    %231 = vmatprep.subr.mxu0 0.0
    %232 = vmatpush1.msra.mxu0 0.0
    %233 = vmatprep.subr.mxu0 0.0
    %234 = vmatpush1.msra.mxu0 0.0
    %235 = vmatprep.subr.mxu0 0.0
    %236 = vmatpush1.msra.mxu0 0.0
    %237 = vmatprep.subr.mxu0 0.0
    %238 = vmatpush1.msra.mxu0 0.0
    %239 = vmatprep.subr.mxu0 0.0
    %240 = vmatpush1.msra.mxu0 0.0
    %241 = vmatprep.subr.mxu0 0.0
    %242 = vmatpush1.msra.mxu0 0.0
    %243 = vmatprep.subr.mxu0 0.0
    %244 = vmatpush1.msra.mxu0 %v204
    %245 = vmatprep.subr.mxu0 0.0
    %246 = vmatpush1.msra.mxu0 %v203
    %247 = vmatprep.subr.mxu0 0.0
    %248 = vmatpush1.msra.mxu0 %v202
    %249 = vmatprep.subr.mxu0 0.0
    %250 = vmatpush1.msra.mxu0 %v201
    %251 = vmatprep.subr.mxu0 0.0
    %252 = vmatpush2.msra.mxu0 0.0
    %253 = vmatprep.subr.mxu0 0.0
    %254 = vmatpush2.msra.mxu0 0.0
    %255 = vmatprep.subr.mxu0 0.0
    %256 = vmatpush2.msra.mxu0 0.0
    %257 = vmatprep.subr.mxu0 0.0
    %258 = vmatpush2.msra.mxu0 0.0
    %259 = vmatprep.subr.mxu0 0.0
    %260 = vmatpush2.msra.mxu0 0.0
    %261 = vmatprep.subr.mxu0 0.0
    %262 = vmatpush2.msra.mxu0 0.0
    %263 = vmatprep.subr.mxu0 0.0
    %264 = vmatpush2.msra.mxu0 0.0
    %265 = vmatprep.subr.mxu0 0.0
    %266 = vmatpush2.msra.mxu0 0.0
    %267 = vmatprep.subr.mxu0 0.0
    %268 = vmatpush2.msra.mxu0 0.0
    %269 = vmatprep.subr.mxu0 0.0
    %270 = vmatpush2.msra.mxu0 0.0
    %271 = vmatprep.subr.mxu0 0.0
    %272 = vmatpush2.msra.mxu0 0.0
    %273 = vmatprep.subr.mxu0 0.0
    %274 = vmatpush2.msra.mxu0 0.0
    %275 = vmatprep.subr.mxu0 0.0
    %276 = vmatpush2.msra.mxu0 0.0
    %277 = vmatprep.subr.mxu0 0.0
    %278 = vmatpush2.msra.mxu0 0.0
    %279 = vmatprep.subr.mxu0 0.0
    %280 = vmatpush2.msra.mxu0 0.0
    %281 = vmatprep.subr.mxu0 0.0
    %282 = vmatpush2.msra.mxu0 0.0
    %283 = vmatprep.mubr.f32.mxu0 0.0
    %284 = vmatmul.mubr.f32.gmra.mxu0 %v214
    %v285 = vpop.f32.mrf.mxu0
    %v286 = vadd.f32 %v210, %v285
    %v287 = vpop.f32.mrf.mxu0
    %288 = vmatprep.mubr.f32.mxu0 0.0
    %289 = vmatmul.mubr.f32.gmra.mxu0 %v217
    %v290 = vpop.f32.mrf.mxu0
    %v291 = vadd.f32 %v210, %v290
    %v292 = vpop.f32.mrf.mxu0
    %293 = vdwg.mxu0
    %v294 = vmax.f32 %v286, 0.0
    %v295 = vmax.f32 %v291, 0.0
    %296 = vst.msk [vmem:[%s6] sm:$0xff] %vm55, %v294
    %297 = vst.msk [vmem:[%s6 + $0x8] sm:$0xff] %vm55, %v295
  $region33: #{gin_critic_forward.4} parent=0 // pred_fallthru
    _
  // Predicated region
  $region34: #{gin_critic_forward.4} parent=0 // pred_check
    _
  $region35: #{gin_critic_forward.4} parent=0 // pred_check_branch
    %299 = sbr.rel (0) target = $region37
  $region36: #{gin_critic_forward.4} parent=0 // pred_region
    _
  $region37: #{gin_critic_forward.4} parent=0 // pred_fallthru
    _
  // Predicated region
  $region38: #{gin_critic_forward.4} parent=0 // pred_check
    _
  $region39: #{gin_critic_forward.4} parent=0 // pred_check_branch
    %301 = sbr.rel (0) target = $region41
  $region40: #{gin_critic_forward.4} parent=0 // pred_region
    _
  $region41: #{gin_critic_forward.4} parent=0 // pred_fallthru
    _

// kernel: gin_critic_forward.3
$region0: #{gin_critic_forward.3}
  #allocation0 [shape = 'u32[]', space=smem, size = 0x4, offset = 0x4, fixed_abs, tag = 'smem constant byte address 0x4 - core index']
  #allocation1 [shape = 'u32[144,128]{1,0:T(1,128)}', space=vmem, size = 0x12000, scoped, tag = 'internal scratch']
  #allocation2 [shape = 'f32[16,3]{1,0:T(8,128)}', space=vmem, size = 0x2000, scoped, tag = 'scratch operand']
  %s0 = inlined_call_operand.vmem [shape: s8[16,16], index: 0, kind: input, shape index: {}]
  %s1 = inlined_call_operand.vmem [shape: bf16[16,3], index: 1, kind: input, shape index: {}]
  %s2 = inlined_call_operand.vmem [shape: f32[3,32], index: 2, kind: input, shape index: {}]
  %s3 = inlined_call_operand.vmem [shape: f32[1,32], index: 3, kind: input, shape index: {}]
  %s4 = inlined_call_operand.vmem [shape: f32[32,16], index: 4, kind: input, shape index: {}]
  %s5 = inlined_call_operand.vmem [shape: f32[1,16], index: 5, kind: input, shape index: {}]
  %s6 = inlined_call_operand.vmem [shape: bf16[16,16], index: 6, kind: output, shape index: {}]
  %s7 = sld [smem:[#allocation0]]
  $region42: #{gin_critic_forward.3} parent=0
    _
  %s9 = ssub.s32 1, %s7
  %s10 = scalar_select 0, %s9, %s7
  // Predicated region
  $region2: #{gin_critic_forward.3} parent=0 // pred_check
    _
  $region3: #{gin_critic_forward.3} parent=0 // pred_check_branch
    %12 = sbr.rel (0) target = $region5
  $region4: #{gin_critic_forward.3} parent=0 // pred_region
    _
  $region5: #{gin_critic_forward.3} parent=0 // pred_fallthru
    _
  // Predicated region
  $region6: #{gin_critic_forward.3} parent=0 // pred_check
    _
  $region7: #{gin_critic_forward.3} parent=0 // pred_check_branch
    %14 = sbr.rel (0) target = $region9
  $region8: #{gin_critic_forward.3} parent=0 // pred_region
    _
  $region9: #{gin_critic_forward.3} parent=0 // pred_fallthru
    _
  // Predicated region
  $region10: #{gin_critic_forward.3} parent=0 // pred_check
    _
  $region11: #{gin_critic_forward.3} parent=0 // pred_check_branch
    %16 = sbr.rel (0) target = $region13
  $region12: #{gin_critic_forward.3} parent=0 // pred_region
    _
  $region13: #{gin_critic_forward.3} parent=0 // pred_fallthru
    _
  // Predicated region
  $region14: #{gin_critic_forward.3} parent=0 // pred_check
    _
  $region15: #{gin_critic_forward.3} parent=0 // pred_check_branch
    %18 = sbr.rel (0) target = $region17
  $region16: #{gin_critic_forward.3} parent=0 // pred_region
    _
  $region17: #{gin_critic_forward.3} parent=0 // pred_fallthru
    _
  // Predicated region
  $region18: #{gin_critic_forward.3} parent=0 // pred_check
    _
  $region19: #{gin_critic_forward.3} parent=0 // pred_check_branch
    %20 = sbr.rel (0) target = $region21
  $region20: #{gin_critic_forward.3} parent=0 // pred_region
    _
  $region21: #{gin_critic_forward.3} parent=0 // pred_fallthru
    _
  // Predicated region
  $region22: #{gin_critic_forward.3} parent=0 // pred_check
    _
  $region23: #{gin_critic_forward.3} parent=0 // pred_check_branch
    %22 = sbr.rel (0) target = $region25
  $region24: #{gin_critic_forward.3} parent=0 // pred_region
    _
  $region25: #{gin_critic_forward.3} parent=0 // pred_fallthru
    _
  %p24 = scmp.eq.s32.totalorder 0, 0
  // Predicated region
  $region26: #{gin_critic_forward.3} parent=0 // pred_check
    %p25 = pneg %p24
  $region27: #{gin_critic_forward.3} parent=0 // pred_check_branch
    %27 = sbr.rel (%p25) target = $region29
  $region28: #{gin_critic_forward.3} parent=0 // pred_region
    %vm28 = vcmask 23552
    %29 = vst.msk [vmem:[#allocation2] sm:$0xff] %vm28, 0.0
    %30 = vst.msk [vmem:[#allocation2 + $0x8] sm:$0xff] %vm28, 0.0
  $region29: #{gin_critic_forward.3} parent=0 // pred_fallthru
    _
  %s31 = smul.u32 0, 16
  %s32 = sshra.s32 %s31, 3
  %s33 = sand.u32 %s31, 7
  %s34 = smul.addr %s32, 4
  %s35 = scalar_lea.vmem %s1, %s34
  %v36 = vld [vmem:[%s35] sm:$0xf]
  %v37 = vld [vmem:[%s35 + $0x4] sm:$0xf]
  %v38 = vld [vmem:[%s0] sm:$0x3]
  %v39 = vld [vmem:[%s0 + $0x2] sm:$0x3]
  %v40 = vunpack.c.l.s8.bf16 %v38
  %v41 = vunpack.c.l.s8.bf16 %v39
  %v42 = vld [vmem:[#allocation2] sm:$0xff]
  %v43 = vld [vmem:[#allocation2 + $0x8] sm:$0xff]
  %v46 = vunpack.c.l.b16 %v40
  %v47 = vunpack.c.l.b16 %v41
  %v48 = vpack.c.b16 %v47, %v46
  %v51 = vunpack.c.l.b16 %v36
  %v52 = vunpack.c.l.b16 %v37
  %v53 = vpack.c.b16 %v52, %v51
  %vm55 = vcmask 130048
  %v57 = vsel %vm55, %v48, 0
  %59 = vmatprep.subr.bf16.mxu0 0
  %60 = vmatpush1.bf16.msra.mxu0 0
  %61 = vmatprep.subr.bf16.mxu0 0
  %62 = vmatpush1.bf16.msra.mxu0 0
  %63 = vmatprep.subr.bf16.mxu0 0
  %64 = vmatpush1.bf16.msra.mxu0 0
  %65 = vmatprep.subr.bf16.mxu0 0
  %66 = vmatpush1.bf16.msra.mxu0 0
  %67 = vmatprep.subr.bf16.mxu0 0
  %68 = vmatpush1.bf16.msra.mxu0 0
  %69 = vmatprep.subr.bf16.mxu0 0
  %70 = vmatpush1.bf16.msra.mxu0 0
  %71 = vmatprep.subr.bf16.mxu0 0
  %72 = vmatpush1.bf16.msra.mxu0 0
  %73 = vmatprep.subr.bf16.mxu0 0
  %74 = vmatpush1.bf16.msra.mxu0 %v53
  %75 = vmatprep.subr.bf16.mxu0 0
  %76 = vmatpush2.bf16.msra.mxu0 0
  %77 = vmatprep.subr.bf16.mxu0 0
  %78 = vmatpush2.bf16.msra.mxu0 0
  %79 = vmatprep.subr.bf16.mxu0 0
  %80 = vmatpush2.bf16.msra.mxu0 0
  %81 = vmatprep.subr.bf16.mxu0 0
  %82 = vmatpush2.bf16.msra.mxu0 0
  %83 = vmatprep.subr.bf16.mxu0 0
  %84 = vmatpush2.bf16.msra.mxu0 0
  %85 = vmatprep.subr.bf16.mxu0 0
  %86 = vmatpush2.bf16.msra.mxu0 0
  %87 = vmatprep.subr.bf16.mxu0 0
  %88 = vmatpush2.bf16.msra.mxu0 0
  %89 = vmatprep.subr.bf16.mxu0 0
  %90 = vmatpush2.bf16.msra.mxu0 0
  %91 = vmatprep.mubr.bf16.mxu0 0
  %92 = vmatmul.mubr.bf16.gmra.mxu0 %v57
  %v93 = vpop.f32.mrf.mxu0
  %v94 = vadd.f32 0.0, %v93
  %v95 = vpop.f32.mrf.mxu0
  %v96 = vpop.f32.mrf.mxu0
  %v97 = vadd.f32 0.0, %v96
  %v98 = vpop.f32.mrf.mxu0
  %99 = vdwg.mxu0
  %v100 = vadd.f32 %v42, %v94
  %v101 = vadd.f32 %v43, %v97
  %vm102 = vcmask 23552
  %103 = vst.msk [vmem:[#allocation2] sm:$0xff] %vm102, %v100
  %104 = vst.msk [vmem:[#allocation2 + $0x8] sm:$0xff] %vm102, %v101
  // Predicated region
  $region30: #{gin_critic_forward.3} parent=0 // pred_check
    %p105 = pneg %p24
  $region31: #{gin_critic_forward.3} parent=0 // pred_check_branch
    %107 = sbr.rel (%p105) target = $region33
  $region32: #{gin_critic_forward.3} parent=0 // pred_region
    %v108 = vld [vmem:[#allocation2] sm:$0xff]
    %v109 = vld [vmem:[#allocation2 + $0x8] sm:$0xff]
    %v110 = vld [vmem:[%s2] sm:$0x7]
    %112 = vset.pattern.permute.xlu0 0
    %113 = vperm.xlu0 %112, %v108
    %v114 = vpop.permute.xlu0 %113
    %117 = vset.pattern.permute.xlu0 0
    %118 = vperm.xlu0 %117, %v109
    %v119 = vpop.permute.xlu0 %118
    %v121 = vlaneseq
    %v122 = vshrl.u32 %v121, 7
    %v123 = vsub.s32 0, %v122
    %v124 = vrot.slane %v110, %v123
    %v125 = vmul.f32 %v114, %v124
    %v126 = vmul.f32 %v119, %v124
    %127 = vset.pattern.permute.xlu0 1
    %128 = vperm.xlu0 %127, %v108
    %v129 = vpop.permute.xlu0 %128
    %131 = vset.pattern.permute.xlu0 1
    %132 = vperm.xlu0 %131, %v109
    %v133 = vpop.permute.xlu0 %132
    %v135 = vlaneseq
    %v136 = vshrl.u32 %v135, 7
    %v137 = vsub.s32 1, %v136
    %v138 = vrot.slane %v110, %v137
    %v139 = vmul.f32 %v129, %v138
    %v140 = vmul.f32 %v133, %v138
    %v141 = vadd.f32 %v125, %v139
    %v142 = vadd.f32 %v126, %v140
    %143 = vset.pattern.permute.xlu0 2
    %144 = vperm.xlu0 %143, %v108
    %v145 = vpop.permute.xlu0 %144
    %147 = vset.pattern.permute.xlu0 2
    %148 = vperm.xlu0 %147, %v109
    %v149 = vpop.permute.xlu0 %148
    %v151 = vlaneseq
    %v152 = vshrl.u32 %v151, 7
    %v153 = vsub.s32 2, %v152
    %v154 = vrot.slane %v110, %v153
    %v155 = vmul.f32 %v145, %v154
    %v156 = vmul.f32 %v149, %v154
    %v157 = vadd.f32 %v141, %v155
    %v158 = vadd.f32 %v142, %v156
    %v159 = vld [vmem:[%s3] sm:$0x1]
    %v161 = vlaneseq
    %v162 = vshrl.u32 %v161, 7
    %v163 = vsub.s32 0, %v162
    %v164 = vrot.slane %v159, %v163
    %v166 = vadd.f32 %v157, %v164
    %v167 = vadd.f32 %v158, %v164
    %v168 = vmax.f32 %v166, 0.0
    %v169 = vmax.f32 %v167, 0.0
    %v170 = vld [vmem:[%s4] sm:$0xff]
    %v171 = vld [vmem:[%s4 + $0x8] sm:$0xff]
    %v172 = vld [vmem:[%s4 + $0x10] sm:$0xff]
    %v173 = vld [vmem:[%s4 + $0x18] sm:$0xff]
    %v174 = vld [vmem:[%s5] sm:$0x1]
    %v176 = vlaneseq
    %v177 = vshrl.u32 %v176, 7
    %v178 = vsub.s32 0, %v177
    %v179 = vrot.slane %v174, %v178
    %vm181 = vcmask 261120
    %v183 = vsel %vm181, %v168, 0
    %v186 = vsel %vm181, %v169, 0
    %188 = vmatprep.subr.mxu0 0.0
    %189 = vmatpush1.msra.mxu0 0.0
    %190 = vmatprep.subr.mxu0 0.0
    %191 = vmatpush1.msra.mxu0 0.0
    %192 = vmatprep.subr.mxu0 0.0
    %193 = vmatpush1.msra.mxu0 0.0
    %194 = vmatprep.subr.mxu0 0.0
    %195 = vmatpush1.msra.mxu0 0.0
    %196 = vmatprep.subr.mxu0 0.0
    %197 = vmatpush1.msra.mxu0 0.0
    %198 = vmatprep.subr.mxu0 0.0
    %199 = vmatpush1.msra.mxu0 0.0
    %200 = vmatprep.subr.mxu0 0.0
    %201 = vmatpush1.msra.mxu0 0.0
    %202 = vmatprep.subr.mxu0 0.0
    %203 = vmatpush1.msra.mxu0 0.0
    %204 = vmatprep.subr.mxu0 0.0
    %205 = vmatpush1.msra.mxu0 0.0
    %206 = vmatprep.subr.mxu0 0.0
    %207 = vmatpush1.msra.mxu0 0.0
    %208 = vmatprep.subr.mxu0 0.0
    %209 = vmatpush1.msra.mxu0 0.0
    %210 = vmatprep.subr.mxu0 0.0
    %211 = vmatpush1.msra.mxu0 0.0
    %212 = vmatprep.subr.mxu0 0.0
    %213 = vmatpush1.msra.mxu0 %v173
    %214 = vmatprep.subr.mxu0 0.0
    %215 = vmatpush1.msra.mxu0 %v172
    %216 = vmatprep.subr.mxu0 0.0
    %217 = vmatpush1.msra.mxu0 %v171
    %218 = vmatprep.subr.mxu0 0.0
    %219 = vmatpush1.msra.mxu0 %v170
    %220 = vmatprep.subr.mxu0 0.0
    %221 = vmatpush2.msra.mxu0 0.0
    %222 = vmatprep.subr.mxu0 0.0
    %223 = vmatpush2.msra.mxu0 0.0
    %224 = vmatprep.subr.mxu0 0.0
    %225 = vmatpush2.msra.mxu0 0.0
    %226 = vmatprep.subr.mxu0 0.0
    %227 = vmatpush2.msra.mxu0 0.0
    %228 = vmatprep.subr.mxu0 0.0
    %229 = vmatpush2.msra.mxu0 0.0
    %230 = vmatprep.subr.mxu0 0.0
    %231 = vmatpush2.msra.mxu0 0.0
    %232 = vmatprep.subr.mxu0 0.0
    %233 = vmatpush2.msra.mxu0 0.0
    %234 = vmatprep.subr.mxu0 0.0
    %235 = vmatpush2.msra.mxu0 0.0
    %236 = vmatprep.subr.mxu0 0.0
    %237 = vmatpush2.msra.mxu0 0.0
    %238 = vmatprep.subr.mxu0 0.0
    %239 = vmatpush2.msra.mxu0 0.0
    %240 = vmatprep.subr.mxu0 0.0
    %241 = vmatpush2.msra.mxu0 0.0
    %242 = vmatprep.subr.mxu0 0.0
    %243 = vmatpush2.msra.mxu0 0.0
    %244 = vmatprep.subr.mxu0 0.0
    %245 = vmatpush2.msra.mxu0 0.0
    %246 = vmatprep.subr.mxu0 0.0
    %247 = vmatpush2.msra.mxu0 0.0
    %248 = vmatprep.subr.mxu0 0.0
    %249 = vmatpush2.msra.mxu0 0.0
    %250 = vmatprep.subr.mxu0 0.0
    %251 = vmatpush2.msra.mxu0 0.0
    %252 = vmatprep.mubr.f32.mxu0 0.0
    %253 = vmatmul.mubr.f32.gmra.mxu0 %v183
    %v254 = vpop.f32.mrf.mxu0
    %v255 = vadd.f32 %v179, %v254
    %v256 = vpop.f32.mrf.mxu0
    %257 = vmatprep.mubr.f32.mxu0 0.0
    %258 = vmatmul.mubr.f32.gmra.mxu0 %v186
    %v259 = vpop.f32.mrf.mxu0
    %v260 = vadd.f32 %v179, %v259
    %v261 = vpop.f32.mrf.mxu0
    %262 = vdwg.mxu0
    %v263 = vmax.f32 %v255, 0.0
    %v264 = vmax.f32 %v260, 0.0
    %v265 = vpack.c.bf16 %v264, %v263
    %v267 = vunpack.c.l.b16 %v265
    %v268 = vunpack.c.h.b16 %v265
    %v269 = vpack.c.b16 %v267, %v267
    %v270 = vpack.c.b16 %v268, %v268
    %vm273 = vcmask 125952
    %274 = vst.msk [vmem:[%s6] sm:$0xf] %vm273, %v269
    %275 = vst.msk [vmem:[%s6 + $0x4] sm:$0xf] %vm273, %v270
  $region33: #{gin_critic_forward.3} parent=0 // pred_fallthru
    _
  // Predicated region
  $region34: #{gin_critic_forward.3} parent=0 // pred_check
    _
  $region35: #{gin_critic_forward.3} parent=0 // pred_check_branch
    %277 = sbr.rel (0) target = $region37
  $region36: #{gin_critic_forward.3} parent=0 // pred_region
    _
  $region37: #{gin_critic_forward.3} parent=0 // pred_fallthru
    _
  // Predicated region
  $region38: #{gin_critic_forward.3} parent=0 // pred_check
    _
  $region39: #{gin_critic_forward.3} parent=0 // pred_check_branch
    %279 = sbr.rel (0) target = $region41
  $region40: #{gin_critic_forward.3} parent=0 // pred_region
    _
  $region41: #{gin_critic_forward.3} parent=0 // pred_fallthru
    _

</llo_original>
